<compile_context>
chip_gen: v5e
topology: v5e:2x2
jax: 0.10.0
libtpu: 0.0.40
codegen_flags: <defaults>
</compile_context>

<pallas_src>
import functools

import jax
import jax.numpy as jnp
from jax.experimental import pallas as pl
from jax.experimental.pallas import tpu as pltpu

STD = 0.1  # Actor(..., std=0.1)


def _round_up(x, m):
    return (x + m - 1) // m * m


def actor_kernel(obs_ref, w1_ref, b1_ref, w2_ref, b2_ref, w3_ref, b3_ref,
                 mu_ref):
    # Feed the MXU in the weights' native dtype (no-op cast when already equal;
    # keeps the fast bf16 path when weights are bf16).  Accumulate in f32.
    x = obs_ref[...].astype(w1_ref.dtype)

    # layer 1: Linear + ReLU  (bias add / max stay in f32)
    h1 = jnp.dot(x, w1_ref[...], preferred_element_type=jnp.float32)
    h1 = jnp.maximum(h1 + b1_ref[...], 0.0)

    # layer 2: Linear + ReLU
    h2 = jnp.dot(h1.astype(w2_ref.dtype), w2_ref[...],
                 preferred_element_type=jnp.float32)
    h2 = jnp.maximum(h2 + b2_ref[...], 0.0)

    # layer 3: Linear + tanh
    mu = jnp.dot(h2.astype(w3_ref.dtype), w3_ref[...],
                 preferred_element_type=jnp.float32)
    mu_ref[...] = jnp.tanh(mu + b3_ref[...]).astype(mu_ref.dtype)


@functools.partial(jax.jit, static_argnames=("block_b",))
def actor_forward(obs, params, *, block_b=512):
    """Returns (mu, std) — the parameters of utils.TruncatedNormal(mu, std)."""
    w1, b1, w2, b2, w3, b3 = params
    B, OBS = obs.shape
    H = w1.shape[1]
    A = w3.shape[1]

    # Batch tile: multiple of 8 sublanes; up to 512 rows to amortize the
    # ~0.35 us per-grid-step overhead once batches are large.
    TB = min(block_b, _round_up(B, 8))
    B_pad = _round_up(B, TB)
    if B_pad != B:
        obs = jnp.pad(obs, ((0, B_pad - B), (0, 0)))

    # Weights/biases stay VMEM-resident across all batch tiles.
    resident = lambda arr: pl.BlockSpec(arr.shape, lambda i: (0, 0))

    flops = 2 * B_pad * (OBS * H + H * H + H * A)
    bytes_accessed = (obs.size * obs.dtype.itemsize
                      + sum(p.size * p.dtype.itemsize for p in params)
                      + B_pad * A * 4)

    mu = pl.pallas_call(
        actor_kernel,
        out_shape=jax.ShapeDtypeStruct((B_pad, A), jnp.float32),
        grid=(B_pad // TB,),
        in_specs=[
            pl.BlockSpec((TB, OBS), lambda i: (i, 0)),
            resident(w1), resident(b1),
            resident(w2), resident(b2),
            resident(w3), resident(b3),
        ],
        out_specs=pl.BlockSpec((TB, A), lambda i: (i, 0)),
        compiler_params=pltpu.CompilerParams(
            dimension_semantics=("parallel",)),
        cost_estimate=pl.CostEstimate(
            flops=flops,
            transcendentals=B_pad * A,
            bytes_accessed=bytes_accessed),
    )(obs, w1, b1, w2, b2, w3, b3)

    mu = mu[:B]
    # std = ones_like(mu) * self.std  -> compile-time constant, built outside
    # the kernel (no HBM writeback / masked lane-sparse store).
    std = jnp.full((B, A), STD, dtype=mu.dtype)
    return mu, std


def init_params(key, obs_dim, hidden_dim, action_dim, dtype=jnp.float32):
    """Deterministic synthetic init (fixed, not orthogonal)."""
    ks = jax.random.split(key, 6)
    scale = lambda fan_in: 1.0 / jnp.sqrt(jnp.float32(fan_in))
    w1 = (jax.random.normal(ks[0], (obs_dim, hidden_dim), jnp.float32)
          * scale(obs_dim)).astype(dtype)
    b1 = jnp.zeros((1, hidden_dim), dtype)
    w2 = (jax.random.normal(ks[1], (hidden_dim, hidden_dim), jnp.float32)
          * scale(hidden_dim)).astype(dtype)
    b2 = jnp.zeros((1, hidden_dim), dtype)
    w3 = (jax.random.normal(ks[2], (hidden_dim, action_dim), jnp.float32)
          * scale(hidden_dim)).astype(dtype)
    b3 = jnp.zeros((1, action_dim), dtype)
    return (w1, b1, w2, b2, w3, b3)


if __name__ == "__main__":
    # Small shapes consistent with the module: obs_shape=(16,), hidden_dim=32,
    # action_shape=(4,), batch=8.
    B, OBS, HID, ACT = 8, 16, 32, 4

    key = jax.random.PRNGKey(0)
    k_obs, k_par = jax.random.split(key)
    obs = jax.random.normal(k_obs, (B, OBS), jnp.float32)
    params = init_params(k_par, OBS, HID, ACT)

    def ref_mu(o, p):
        w1, b1, w2, b2, w3, b3 = [x.astype(jnp.float32) for x in p]
        h1 = jnp.maximum(o.astype(jnp.float32) @ w1 + b1, 0.0)
        h2 = jnp.maximum(h1 @ w2 + b2, 0.0)
        return jnp.tanh(h2 @ w3 + b3)

    # f32 path at the toy shape.
    mu, std = actor_forward(obs, params)
    jax.block_until_ready((mu, std))
    assert mu.shape == (B, ACT) and std.shape == (B, ACT)
    assert jnp.allclose(mu, ref_mu(obs, params), atol=1e-5), "mu mismatch"
    assert jnp.allclose(std, jnp.full((B, ACT), STD)), "std mismatch"

    # Ragged and larger batches exercise the batch grid + padding path.
    for B2 in (10, 1024):
        obs2 = jax.random.normal(jax.random.PRNGKey(1), (B2, OBS), jnp.float32)
        mu2, std2 = actor_forward(obs2, params)
        jax.block_until_ready((mu2, std2))
        assert mu2.shape == (B2, ACT)
        assert jnp.allclose(mu2, ref_mu(obs2, params), atol=1e-5), "batched mu mismatch"

    # bf16 weights/activations (v6e/v7x MXU path) with f32 accumulation.
    params_bf16 = jax.tree.map(lambda p: p.astype(jnp.bfloat16), params)
    mu_bf, _ = actor_forward(obs.astype(jnp.bfloat16), params_bf16)
    jax.block_until_ready(mu_bf)
    assert jnp.allclose(mu_bf, ref_mu(obs, params), atol=2e-2), "bf16 mu mismatch"

    # TODO(synk): TruncatedNormal sampling (dist.sample / rsample) is not part
    # of forward()'s compute graph; we return the distribution parameters only.
    print("KERNEL_OK")
</pallas_src>

<mosaic_0001>
module attributes {stable_mosaic.version = 11 : i64} {
  func.func @actor_kernel(%arg0: i32, %arg1: memref<8x16xf32, #tpu.memory_space<vmem>>, %arg2: memref<16x32xf32, #tpu.memory_space<vmem>>, %arg3: memref<1x32xf32, #tpu.memory_space<vmem>>, %arg4: memref<32x32xf32, #tpu.memory_space<vmem>>, %arg5: memref<1x32xf32, #tpu.memory_space<vmem>>, %arg6: memref<32x4xf32, #tpu.memory_space<vmem>>, %arg7: memref<1x4xf32, #tpu.memory_space<vmem>>, %arg8: memref<8x4xf32, #tpu.memory_space<vmem>>) attributes {dimension_semantics = [#tpu.dimension_semantics<parallel>], iteration_bounds = array<i64: 1>, scalar_prefetch = 0 : i64, scratch_operands = 0 : i64, tpu.core_type = #tpu.core_type<tc>, window_params = [{transform_indices = @transform_0, window_bounds = array<i64: 8, 16>}, {pipeline_mode = #tpu.pipeline_mode<synchronous>, transform_indices = @transform_1, window_bounds = array<i64: 16, 32>}, {pipeline_mode = #tpu.pipeline_mode<synchronous>, transform_indices = @transform_2, window_bounds = array<i64: 1, 32>}, {pipeline_mode = #tpu.pipeline_mode<synchronous>, transform_indices = @transform_3, window_bounds = array<i64: 32, 32>}, {pipeline_mode = #tpu.pipeline_mode<synchronous>, transform_indices = @transform_4, window_bounds = array<i64: 1, 32>}, {pipeline_mode = #tpu.pipeline_mode<synchronous>, transform_indices = @transform_5, window_bounds = array<i64: 32, 4>}, {pipeline_mode = #tpu.pipeline_mode<synchronous>, transform_indices = @transform_6, window_bounds = array<i64: 1, 4>}, {transform_indices = @transform_7, window_bounds = array<i64: 8, 4>}]} {
    %c0 = arith.constant 0 : index
    %c0_0 = arith.constant 0 : index
    %0 = vector.load %arg1[%c0, %c0_0] : memref<8x16xf32, #tpu.memory_space<vmem>>, vector<8x16xf32>
    %c0_1 = arith.constant 0 : index
    %c0_2 = arith.constant 0 : index
    %1 = vector.load %arg2[%c0_1, %c0_2] : memref<16x32xf32, #tpu.memory_space<vmem>>, vector<16x32xf32>
    %cst = arith.constant dense<0.000000e+00> : vector<8x32xf32>
    %2 = tpu.matmul %0, %1, %cst {dimension_numbers = #tpu.dot_dimension_numbers<[1], [0], [0], [1], [0, 0, 1, 1], [], []>} : vector<8x16xf32>, vector<16x32xf32>, vector<8x32xf32> -> vector<8x32xf32>
    %c0_3 = arith.constant 0 : index
    %c0_4 = arith.constant 0 : index
    %3 = vector.load %arg3[%c0_3, %c0_4] : memref<1x32xf32, #tpu.memory_space<vmem>>, vector<1x32xf32>
    %4 = vector.broadcast %3 : vector<1x32xf32> to vector<8x32xf32>
    %5 = arith.addf %2, %4 : vector<8x32xf32>
    %cst_5 = arith.constant 0.000000e+00 : f32
    %6 = vector.broadcast %cst_5 : f32 to vector<8x32xf32>
    %7 = arith.maximumf %5, %6 : vector<8x32xf32>
    %c0_6 = arith.constant 0 : index
    %c0_7 = arith.constant 0 : index
    %8 = vector.load %arg4[%c0_6, %c0_7] : memref<32x32xf32, #tpu.memory_space<vmem>>, vector<32x32xf32>
    %cst_8 = arith.constant dense<0.000000e+00> : vector<8x32xf32>
    %9 = tpu.matmul %7, %8, %cst_8 {dimension_numbers = #tpu.dot_dimension_numbers<[1], [0], [0], [1], [0, 0, 1, 1], [], []>} : vector<8x32xf32>, vector<32x32xf32>, vector<8x32xf32> -> vector<8x32xf32>
    %c0_9 = arith.constant 0 : index
    %c0_10 = arith.constant 0 : index
    %10 = vector.load %arg5[%c0_9, %c0_10] : memref<1x32xf32, #tpu.memory_space<vmem>>, vector<1x32xf32>
    %11 = vector.broadcast %10 : vector<1x32xf32> to vector<8x32xf32>
    %12 = arith.addf %9, %11 : vector<8x32xf32>
    %cst_11 = arith.constant 0.000000e+00 : f32
    %13 = vector.broadcast %cst_11 : f32 to vector<8x32xf32>
    %14 = arith.maximumf %12, %13 : vector<8x32xf32>
    %c0_12 = arith.constant 0 : index
    %c0_13 = arith.constant 0 : index
    %15 = vector.load %arg6[%c0_12, %c0_13] : memref<32x4xf32, #tpu.memory_space<vmem>>, vector<32x4xf32>
    %cst_14 = arith.constant dense<0.000000e+00> : vector<8x4xf32>
    %16 = tpu.matmul %14, %15, %cst_14 {dimension_numbers = #tpu.dot_dimension_numbers<[1], [0], [0], [1], [0, 0, 1, 1], [], []>} : vector<8x32xf32>, vector<32x4xf32>, vector<8x4xf32> -> vector<8x4xf32>
    %c0_15 = arith.constant 0 : index
    %c0_16 = arith.constant 0 : index
    %17 = vector.load %arg7[%c0_15, %c0_16] : memref<1x4xf32, #tpu.memory_space<vmem>>, vector<1x4xf32>
    %18 = vector.broadcast %17 : vector<1x4xf32> to vector<8x4xf32>
    %19 = arith.addf %16, %18 : vector<8x4xf32>
    %20 = math.tanh %19 : vector<8x4xf32>
    %c0_17 = arith.constant 0 : index
    %c0_18 = arith.constant 0 : index
    %21 = vector.load %arg8[%c0_17, %c0_18] : memref<8x4xf32, #tpu.memory_space<vmem>>, vector<8x4xf32>
    tpu.vector_store %arg8[%c0_17, %c0_18], %20 {strides = array<i32>} : memref<8x4xf32, #tpu.memory_space<vmem>>, vector<8x4xf32>,
    return
  }
  func.func @transform_0(%arg0: i32) -> (i32, i32) {
    %c0_i32 = arith.constant 0 : i32
    %c0_i32_0 = arith.constant 0 : i32
    return %arg0, %c0_i32 : i32, i32
  }
  func.func @transform_1(%arg0: i32) -> (i32, i32) {
    %c0_i32 = arith.constant 0 : i32
    %c0_i32_0 = arith.constant 0 : i32
    %c0_i32_1 = arith.constant 0 : i32
    return %c0_i32, %c0_i32_0 : i32, i32
  }
  func.func @transform_2(%arg0: i32) -> (i32, i32) {
    %c0_i32 = arith.constant 0 : i32
    %c0_i32_0 = arith.constant 0 : i32
    %c0_i32_1 = arith.constant 0 : i32
    return %c0_i32, %c0_i32_0 : i32, i32
  }
  func.func @transform_3(%arg0: i32) -> (i32, i32) {
    %c0_i32 = arith.constant 0 : i32
    %c0_i32_0 = arith.constant 0 : i32
    %c0_i32_1 = arith.constant 0 : i32
    return %c0_i32, %c0_i32_0 : i32, i32
  }
  func.func @transform_4(%arg0: i32) -> (i32, i32) {
    %c0_i32 = arith.constant 0 : i32
    %c0_i32_0 = arith.constant 0 : i32
    %c0_i32_1 = arith.constant 0 : i32
    return %c0_i32, %c0_i32_0 : i32, i32
  }
  func.func @transform_5(%arg0: i32) -> (i32, i32) {
    %c0_i32 = arith.constant 0 : i32
    %c0_i32_0 = arith.constant 0 : i32
    %c0_i32_1 = arith.constant 0 : i32
    return %c0_i32, %c0_i32_0 : i32, i32
  }
  func.func @transform_6(%arg0: i32) -> (i32, i32) {
    %c0_i32 = arith.constant 0 : i32
    %c0_i32_0 = arith.constant 0 : i32
    %c0_i32_1 = arith.constant 0 : i32
    return %c0_i32, %c0_i32_0 : i32, i32
  }
  func.func @transform_7(%arg0: i32) -> (i32, i32) {
    %c0_i32 = arith.constant 0 : i32
    %c0_i32_0 = arith.constant 0 : i32
    return %arg0, %c0_i32 : i32, i32
  }
}

</mosaic_0001>

<llo_original>
// kernel: actor_forward.1
$region0: #{actor_forward.1}
  #allocation0 [shape = 'u32[]', space=smem, size = 0x4, offset = 0x4, fixed_abs, tag = 'smem constant byte address 0x4 - core index']
  #allocation1 [shape = 'u32[72,128]{1,0:T(1,128)}', space=vmem, size = 0x9000, scoped, tag = 'internal scratch']
  %s0 = inlined_call_operand.vmem [shape: f32[8,16], index: 0, kind: input, shape index: {}]
  %s1 = inlined_call_operand.hbm [shape: f32[16,32], index: 1, kind: input, shape index: {}]
  %s2 = inlined_call_operand.hbm [shape: f32[1,32], index: 2, kind: input, shape index: {}]
  %s3 = inlined_call_operand.vmem [shape: f32[32,32], index: 3, kind: input, shape index: {}]
  %s4 = inlined_call_operand.hbm [shape: f32[1,32], index: 4, kind: input, shape index: {}]
  %s5 = inlined_call_operand.vmem [shape: f32[32,4], index: 5, kind: input, shape index: {}]
  %s6 = inlined_call_operand.hbm [shape: f32[1,4], index: 6, kind: input, shape index: {}]
  %s7 = inlined_call_operand.vmem [shape: f32[8,4], index: 7, kind: output, shape index: {}]
  %s8 = sld [smem:[#allocation0]]
  $region54: #{actor_forward.1} parent=0
    _
  %s10 = ssub.s32 1, %s8
  %s11 = scalar_select 0, %s10, %s8
  $region1: #{actor_forward.1} parent=0
    #allocation2 [shape = 'u8[8192]{0}', space=vmem, size = 0x2000, scoped, tag = 'input window, operand 1, single buffered']
    #allocation3 [shape = 's32[1]{0}', space=sflag, size = 0x4, scoped, tag = 'scoped memory for actor_forward.1']
    #allocation4 [shape = 'u8[512]{0}', space=vmem, size = 0x400, scoped, tag = 'input window, operand 2, single buffered']
    #allocation5 [shape = 's32[1]{0}', space=sflag, size = 0x4, scoped, tag = 'scoped memory for actor_forward.1']
    #allocation6 [shape = 'u8[512]{0}', space=vmem, size = 0x400, scoped, tag = 'input window, operand 4, single buffered']
    #allocation7 [shape = 'u8[512]{0}', space=vmem, size = 0x400, scoped, tag = 'input window, operand 6, single buffered']
    #allocation8 [shape = 's32[1]{0}', space=sflag, size = 0x4, scoped, tag = 'scoped memory for actor_forward.1']
    %12 = vsyncpa [#allocation3], 0
    %13 = vsyncpa [#allocation5], 0
    %14 = vsyncpa [#allocation8], 0
    // Predicated region
    $region2: #{actor_forward.1} parent=1 // pred_check
      _
    $region3: #{actor_forward.1} parent=1 // pred_check_branch
      %16 = sbr.rel (0) target = $region5
    $region4: #{actor_forward.1} parent=1 // pred_region
      _
    $region5: #{actor_forward.1} parent=1 // pred_fallthru
      _
    // Predicated region
    $region6: #{actor_forward.1} parent=1 // pred_check
      _
    $region7: #{actor_forward.1} parent=1 // pred_check_branch
      %18 = sbr.rel (0) target = $region9
    $region8: #{actor_forward.1} parent=1 // pred_region
      %20 = vsyncadd [#allocation3], 0
      %s21 = sshll.u32 %s1, 4
      %s22 = int_to_ptr.hbm [resolvable:$true] %s21
      %s23 = sshll.u32 [#allocation2], 4
      %s24 = int_to_ptr.vmem [resolvable:$true] %s23
      %29 = dma.hbm_to_vmem [thread:$0]  %s22, 256, %s24, [#allocation3], 128, 128, 8
    $region9: #{actor_forward.1} parent=1 // pred_fallthru
      _
    // Predicated region
    $region10: #{actor_forward.1} parent=1 // pred_check
      _
    $region11: #{actor_forward.1} parent=1 // pred_check_branch
      %31 = sbr.rel (0) target = $region13
    $region12: #{actor_forward.1} parent=1 // pred_region
      %33 = vsyncadd [#allocation5], 0
      %s35 = sshll.u32 %s2, 4
      %s36 = int_to_ptr.hbm [resolvable:$true] %s35
      %s37 = sshll.u32 [#allocation4], 4
      %s38 = int_to_ptr.vmem [resolvable:$true] %s37
      %40 = dma.hbm_to_vmem [thread:$0]  %s36, 16, %s38, [#allocation5]
    $region13: #{actor_forward.1} parent=1 // pred_fallthru
      _
    // Predicated region
    $region14: #{actor_forward.1} parent=1 // pred_check
      _
    $region15: #{actor_forward.1} parent=1 // pred_check_branch
      %42 = sbr.rel (0) target = $region17
    $region16: #{actor_forward.1} parent=1 // pred_region
      _
    $region17: #{actor_forward.1} parent=1 // pred_fallthru
      _
    // Predicated region
    $region18: #{actor_forward.1} parent=1 // pred_check
      _
    $region19: #{actor_forward.1} parent=1 // pred_check_branch
      %44 = sbr.rel (0) target = $region21
    $region20: #{actor_forward.1} parent=1 // pred_region
      %46 = vsyncadd [#allocation5], 0
      %s48 = sshll.u32 %s4, 4
      %s49 = int_to_ptr.hbm [resolvable:$true] %s48
      %s50 = sshll.u32 [#allocation6], 4
      %s51 = int_to_ptr.vmem [resolvable:$true] %s50
      %53 = dma.hbm_to_vmem [thread:$0]  %s49, 16, %s51, [#allocation5]
    $region21: #{actor_forward.1} parent=1 // pred_fallthru
      _
    // Predicated region
    $region22: #{actor_forward.1} parent=1 // pred_check
      _
    $region23: #{actor_forward.1} parent=1 // pred_check_branch
      %55 = sbr.rel (0) target = $region25
    $region24: #{actor_forward.1} parent=1 // pred_region
      _
    $region25: #{actor_forward.1} parent=1 // pred_fallthru
      _
    // Predicated region
    $region26: #{actor_forward.1} parent=1 // pred_check
      _
    $region27: #{actor_forward.1} parent=1 // pred_check_branch
      %57 = sbr.rel (0) target = $region29
    $region28: #{actor_forward.1} parent=1 // pred_region
      %59 = vsyncadd [#allocation8], 0
      %s61 = sshll.u32 %s6, 4
      %s62 = int_to_ptr.hbm [resolvable:$true] %s61
      %s63 = sshll.u32 [#allocation7], 4
      %s64 = int_to_ptr.vmem [resolvable:$true] %s63
      %66 = dma.hbm_to_vmem [thread:$0]  %s62, 16, %s64, [#allocation8]
    $region29: #{actor_forward.1} parent=1 // pred_fallthru
      _
    // Predicated region
    $region30: #{actor_forward.1} parent=1 // pred_check
      _
    $region31: #{actor_forward.1} parent=1 // pred_check_branch
      %68 = sbr.rel (0) target = $region33
    $region32: #{actor_forward.1} parent=1 // pred_region
      %70 = dma.done [#allocation3], 256
    $region33: #{actor_forward.1} parent=1 // pred_fallthru
      _
    // Predicated region
    $region34: #{actor_forward.1} parent=1 // pred_check
      _
    $region35: #{actor_forward.1} parent=1 // pred_check_branch
      %72 = sbr.rel (0) target = $region37
    $region36: #{actor_forward.1} parent=1 // pred_region
      %74 = dma.done [#allocation5], 16
    $region37: #{actor_forward.1} parent=1 // pred_fallthru
      _
    // Predicated region
    $region38: #{actor_forward.1} parent=1 // pred_check
      _
    $region39: #{actor_forward.1} parent=1 // pred_check_branch
      %76 = sbr.rel (0) target = $region41
    $region40: #{actor_forward.1} parent=1 // pred_region
      %78 = dma.done [#allocation5], 16
    $region41: #{actor_forward.1} parent=1 // pred_fallthru
      _
    // Predicated region
    $region42: #{actor_forward.1} parent=1 // pred_check
      _
    $region43: #{actor_forward.1} parent=1 // pred_check_branch
      %80 = sbr.rel (0) target = $region45
    $region44: #{actor_forward.1} parent=1 // pred_region
      %82 = dma.done [#allocation8], 16
    $region45: #{actor_forward.1} parent=1 // pred_fallthru
      _
    %v83 = vld [vmem:[%s0] sm:$0xff]
    %v84 = vld [vmem:[#allocation2] sm:$0xff]
    %v85 = vld [vmem:[#allocation2 + $0x8] sm:$0xff]
    %v86 = vld [vmem:[#allocation4] sm:$0x1]
    %v88 = vperm.slane %v86, 0
    %vm90 = vcmask 130048
    %v92 = vsel %vm90, %v83, 0
    %94 = vmatpush.msra.mxu0 0.0
    %95 = vmatpush.msra.mxu0 0.0
    %96 = vmatpush.msra.mxu0 0.0
    %97 = vmatpush.msra.mxu0 0.0
    %98 = vmatpush.msra.mxu0 0.0
    %99 = vmatpush.msra.mxu0 0.0
    %100 = vmatpush.msra.mxu0 0.0
    %101 = vmatpush.msra.mxu0 0.0
    %102 = vmatpush.msra.mxu0 0.0
    %103 = vmatpush.msra.mxu0 0.0
    %104 = vmatpush.msra.mxu0 0.0
    %105 = vmatpush.msra.mxu0 0.0
    %106 = vmatpush.msra.mxu0 0.0
    %107 = vmatpush.msra.mxu0 0.0
    %108 = vmatpush.msra.mxu0 %v85
    %109 = vmatpush.msra.mxu0 %v84
    %110 = vmatmul.f32.gmra.mxu0 %v92
    %v111 = vpop.f32.mrf.mxu0
    %v112 = vadd.f32 %v88, %v111
    %113 = vdwg.mxu0
    %v114 = vmax.f32 %v112, 0.0
    %v115 = vld [vmem:[%s3] sm:$0xff]
    %v116 = vld [vmem:[%s3 + $0x8] sm:$0xff]
    %v117 = vld [vmem:[%s3 + $0x10] sm:$0xff]
    %v118 = vld [vmem:[%s3 + $0x18] sm:$0xff]
    %v119 = vld [vmem:[#allocation6] sm:$0x1]
    %v121 = vperm.slane %v119, 0
    %vm123 = vcmask 261120
    %v125 = vsel %vm123, %v114, 0
    %127 = vmatpush.msra.mxu0 0.0
    %128 = vmatpush.msra.mxu0 0.0
    %129 = vmatpush.msra.mxu0 0.0
    %130 = vmatpush.msra.mxu0 0.0
    %131 = vmatpush.msra.mxu0 0.0
    %132 = vmatpush.msra.mxu0 0.0
    %133 = vmatpush.msra.mxu0 0.0
    %134 = vmatpush.msra.mxu0 0.0
    %135 = vmatpush.msra.mxu0 0.0
    %136 = vmatpush.msra.mxu0 0.0
    %137 = vmatpush.msra.mxu0 0.0
    %138 = vmatpush.msra.mxu0 0.0
    %139 = vmatpush.msra.mxu0 %v118
    %140 = vmatpush.msra.mxu0 %v117
    %141 = vmatpush.msra.mxu0 %v116
    %142 = vmatpush.msra.mxu0 %v115
    %143 = vmatmul.f32.gmra.mxu0 %v125
    %v144 = vpop.f32.mrf.mxu0
    %v145 = vadd.f32 %v121, %v144
    %146 = vdwg.mxu0
    %v147 = vmax.f32 %v145, 0.0
    %v148 = vld [vmem:[%s5] sm:$0xff]
    %v149 = vld [vmem:[%s5 + $0x8] sm:$0xff]
    %v150 = vld [vmem:[%s5 + $0x10] sm:$0xff]
    %v151 = vld [vmem:[%s5 + $0x18] sm:$0xff]
    %v152 = vld [vmem:[#allocation7] sm:$0x1]
    %v154 = vperm.slane %v152, 0
    %v157 = vsel %vm123, %v147, 0
    %159 = vmatpush.msra.mxu0 0.0
    %160 = vmatpush.msra.mxu0 0.0
    %161 = vmatpush.msra.mxu0 0.0
    %162 = vmatpush.msra.mxu0 0.0
    %163 = vmatpush.msra.mxu0 0.0
    %164 = vmatpush.msra.mxu0 0.0
    %165 = vmatpush.msra.mxu0 0.0
    %166 = vmatpush.msra.mxu0 0.0
    %167 = vmatpush.msra.mxu0 0.0
    %168 = vmatpush.msra.mxu0 0.0
    %169 = vmatpush.msra.mxu0 0.0
    %170 = vmatpush.msra.mxu0 0.0
    %171 = vmatpush.msra.mxu0 %v151
    %172 = vmatpush.msra.mxu0 %v150
    %173 = vmatpush.msra.mxu0 %v149
    %174 = vmatpush.msra.mxu0 %v148
    %175 = vmatmul.f32.gmra.mxu0 %v157
    %v176 = vpop.f32.mrf.mxu0
    %v177 = vadd.f32 %v154, %v176
    %178 = vdwg.mxu0
    %v179 = vtanh.pop %v177
    %vm180 = vcmask 31744
    %181 = vst.msk [vmem:[%s7] sm:$0xff] %vm180, %v179
    // Predicated region
    $region46: #{actor_forward.1} parent=1 // pred_check
      _
    $region47: #{actor_forward.1} parent=1 // pred_check_branch
      %183 = sbr.rel (0) target = $region49
    $region48: #{actor_forward.1} parent=1 // pred_region
      _
    $region49: #{actor_forward.1} parent=1 // pred_fallthru
      _
    // Predicated region
    $region50: #{actor_forward.1} parent=1 // pred_check
      _
    $region51: #{actor_forward.1} parent=1 // pred_check_branch
      %185 = sbr.rel (0) target = $region53
    $region52: #{actor_forward.1} parent=1 // pred_region
      _
    $region53: #{actor_forward.1} parent=1 // pred_fallthru
      _
    %186 = vsyncpa [#allocation3], 1
    %187 = vsyncpa [#allocation5], 1
    %188 = vsyncpa [#allocation8], 1

</llo_original>
